<compile_context>
chip_gen: v7x
topology: tpu7x:2x2x1
jax: 0.10.0
libtpu: 0.0.40
codegen_flags: <defaults>
</compile_context>

<pallas_src>
import functools

import jax
import jax.numpy as jnp
from jax.experimental import pallas as pl
from jax.experimental.pallas import tpu as pltpu

MAX_TILE_ROWS = 1024  # multiple of 8; (1024,128) f32 block = 512 KiB
NEG_INF = -1e30       # fill value for padded vocab columns


def _round_up(x, m):
    return ((x + m - 1) // m) * m


def _train_kernel(idx_ref, tgt_ref, table_ref, logits_ref, loss_ref, *, n_valid):
    # idx_ref    : (TILE, 1)  int32 token ids
    # tgt_ref    : (TILE, 1)  int32 target ids
    # table_ref  : (Vp, Vp)   float32 padded embedding table (VMEM-resident)
    # logits_ref : (TILE, Vp) float32 (lane-dense, Vp multiple of 128)
    # loss_ref   : (1, 128)   float32 per-block partial loss sum (lane-broadcast)
    tile = idx_ref.shape[0]
    vp = table_ref.shape[1]

    idx = idx_ref[...]                                            # (TILE, 1)
    tgt = tgt_ref[...]                                            # (TILE, 1)
    col = jax.lax.broadcasted_iota(jnp.int32, (tile, vp), 1)      # (TILE, Vp)

    # Embedding lookup as one-hot matmul on the MXU (exact row gather).
    onehot = (col == idx).astype(jnp.float32)                     # (TILE, Vp)
    logits = jnp.dot(onehot, table_ref[...],
                     preferred_element_type=jnp.float32)          # (TILE, Vp)
    logits_ref[...] = logits

    # Cross-entropy: logsumexp(logits) - logits[target], per row.
    # Padded vocab columns hold -1e30 -> exp underflows to 0, max unaffected.
    m = jnp.max(logits, axis=-1, keepdims=True)                   # (TILE, 1)
    lse = m + jnp.log(jnp.sum(jnp.exp(logits - m), axis=-1, keepdims=True))
    tgt_logit = jnp.sum(jnp.where(col == tgt, logits, 0.0),
                        axis=-1, keepdims=True)                   # (TILE, 1)
    loss_rows = lse - tgt_logit                                   # (TILE, 1)

    # Zero rows that are pure padding, reduce to one per-block partial sum and
    # store it lane-dense (all 128 lanes carry the same value).
    row = pl.program_id(0) * tile + jax.lax.broadcasted_iota(
        jnp.int32, (tile, 1), 0)
    masked = jnp.where(row < n_valid, loss_rows, 0.0)
    loss_ref[...] = jnp.full(loss_ref.shape, jnp.sum(masked), jnp.float32)


def _infer_kernel(idx_ref, table_ref, logits_ref):
    # Inference path: logits only, no cross-entropy work.
    tile = idx_ref.shape[0]
    vp = table_ref.shape[1]
    col = jax.lax.broadcasted_iota(jnp.int32, (tile, vp), 1)
    onehot = (col == idx_ref[...]).astype(jnp.float32)
    logits_ref[...] = jnp.dot(onehot, table_ref[...],
                              preferred_element_type=jnp.float32)


def _pad_tokens(flat, n_pad):
    n = flat.shape[0]
    flat = flat.astype(jnp.int32).reshape(n, 1)
    if n_pad > n:
        flat = jnp.pad(flat, ((0, n_pad - n), (0, 0)))
    return flat


def _run_train(idx_flat, tgt_flat, table_p, n_valid, tile, n_pad):
    vp = table_p.shape[1]
    nb = n_pad // tile
    idx2d = _pad_tokens(idx_flat, n_pad)
    tgt2d = _pad_tokens(tgt_flat, n_pad)
    kernel = functools.partial(_train_kernel, n_valid=n_valid)
    cost = pl.CostEstimate(
        flops=2 * n_pad * vp * vp,
        transcendentals=n_pad * vp + n_pad,
        bytes_accessed=(n_pad * vp * 4      # logits writeback
                        + vp * vp * 4       # table (read once)
                        + n_pad * 8         # idx + targets
                        + nb * 128 * 4),    # partial loss sums
    )
    logits_p, partials = pl.pallas_call(
        kernel,
        out_shape=(
            jax.ShapeDtypeStruct((n_pad, vp), jnp.float32),
            jax.ShapeDtypeStruct((1, nb * 128), jnp.float32),
        ),
        grid=(nb,),
        in_specs=[
            pl.BlockSpec((tile, 1), lambda i: (i, 0)),
            pl.BlockSpec((tile, 1), lambda i: (i, 0)),
            pl.BlockSpec((vp, vp), lambda i: (0, 0)),   # table stays resident
        ],
        out_specs=(
            pl.BlockSpec((tile, vp), lambda i: (i, 0)),
            pl.BlockSpec((1, 128), lambda i: (0, i)),
        ),
        compiler_params=pltpu.CompilerParams(
            dimension_semantics=("parallel",)),
        cost_estimate=cost,
    )(idx2d, tgt2d, table_p)
    return logits_p, partials


def _run_infer(idx_flat, table_p, tile, n_pad):
    vp = table_p.shape[1]
    nb = n_pad // tile
    idx2d = _pad_tokens(idx_flat, n_pad)
    cost = pl.CostEstimate(
        flops=2 * n_pad * vp * vp,
        transcendentals=0,
        bytes_accessed=n_pad * vp * 4 + vp * vp * 4 + n_pad * 4,
    )
    return pl.pallas_call(
        _infer_kernel,
        out_shape=jax.ShapeDtypeStruct((n_pad, vp), jnp.float32),
        grid=(nb,),
        in_specs=[
            pl.BlockSpec((tile, 1), lambda i: (i, 0)),
            pl.BlockSpec((vp, vp), lambda i: (0, 0)),
        ],
        out_specs=pl.BlockSpec((tile, vp), lambda i: (i, 0)),
        compiler_params=pltpu.CompilerParams(
            dimension_semantics=("parallel",)),
        cost_estimate=cost,
    )(idx2d, table_p)


class BigramLanguageModel:
    """JAX/Pallas port of the PyTorch BigramLanguageModel forward pass."""

    def __init__(self, vocab_size, key):
        # nn.Embedding default init: N(0, 1)
        self.vocab_size = vocab_size
        self.table = jax.random.normal(key, (vocab_size, vocab_size),
                                       dtype=jnp.float32)
        # Pad to a multiple of 128: padded columns = -1e30 so they never
        # contribute to max / logsumexp; padded rows are never selected by
        # in-range token ids.
        vp = max(128, _round_up(vocab_size, 128))
        tab_p = jnp.full((vp, vp), NEG_INF, dtype=jnp.float32)
        self.table_padded = tab_p.at[:vocab_size, :vocab_size].set(self.table)

    def _tiling(self, n):
        tile = min(MAX_TILE_ROWS, _round_up(n, 8))
        n_pad = _round_up(n, tile)
        return tile, n_pad

    def forward(self, idx, targets=None):
        B, T = idx.shape
        V = self.vocab_size
        N = B * T
        tile, n_pad = self._tiling(N)
        idx_flat = idx.reshape(N)

        if targets is None:
            logits_p = _run_infer(idx_flat, self.table_padded, tile, n_pad)
            # PyTorch returns (B, T, C) logits when targets is None.
            return logits_p[:N, :V].reshape(B, T, V), None
        else:
            tgt_flat = targets.reshape(N)
            logits_p, partials = _run_train(idx_flat, tgt_flat,
                                            self.table_padded, N, tile, n_pad)
            nb = partials.shape[1] // 128
            # Each block's 128 lanes carry the same partial sum; take lane 0.
            loss = jnp.sum(partials.reshape(nb, 128)[:, 0]) / N
            # PyTorch returns (B*T, C) logits when targets are given.
            return logits_p[:N, :V], loss

    # TODO(synk): generate() uses a torch.multinomial sampling loop with a
    # growing sequence; it is host-side control flow, not a kernel hot path,
    # so it is omitted here.


if __name__ == "__main__":
    key = jax.random.PRNGKey(0)
    k_tab, k_idx, k_tgt = jax.random.split(key, 3)

    vocab_size = 65   # e.g. tiny-shakespeare char vocab
    B, T = 2, 8

    model = BigramLanguageModel(vocab_size, k_tab)
    idx = jax.random.randint(k_idx, (B, T), 0, vocab_size, dtype=jnp.int32)
    targets = jax.random.randint(k_tgt, (B, T), 0, vocab_size, dtype=jnp.int32)

    # With targets: logits (B*T, V), scalar loss.
    logits, loss = model.forward(idx, targets)
    jax.block_until_ready((logits, loss))

    # Without targets: logits (B, T, V), loss None.
    logits_nt, loss_nt = model.forward(idx, None)
    jax.block_until_ready(logits_nt)

    # Sanity check against a pure-JAX reference.
    ref_logits = model.table[idx.reshape(-1)]
    ref_lse = jax.nn.logsumexp(ref_logits, axis=-1)
    ref_tgt = jnp.take_along_axis(ref_logits,
                                  targets.reshape(-1, 1), axis=-1)[:, 0]
    ref_loss = jnp.mean(ref_lse - ref_tgt)
    assert logits.shape == (B * T, vocab_size)
    assert logits_nt.shape == (B, T, vocab_size)
    assert loss_nt is None
    assert jnp.allclose(logits, ref_logits, atol=1e-5)
    assert jnp.allclose(logits_nt.reshape(B * T, vocab_size), ref_logits,
                        atol=1e-5)
    assert jnp.allclose(loss, ref_loss, atol=1e-5)

    print("KERNEL_OK")
</pallas_src>

<mosaic_0001>
module attributes {stable_mosaic.version = 11 : i64} {
  func.func @_train_kernel(%arg0: i32, %arg1: memref<16x1xi32, #tpu.memory_space<vmem>>, %arg2: memref<16x1xi32, #tpu.memory_space<vmem>>, %arg3: memref<128x128xf32, #tpu.memory_space<vmem>>, %arg4: memref<16x128xf32, #tpu.memory_space<vmem>>, %arg5: memref<1x128xf32, #tpu.memory_space<vmem>>) attributes {dimension_semantics = [#tpu.dimension_semantics<parallel>], iteration_bounds = array<i64: 1>, scalar_prefetch = 0 : i64, scratch_operands = 0 : i64, tpu.core_type = #tpu.core_type<tc>, window_params = [{transform_indices = @transform_0, window_bounds = array<i64: 16, 1>}, {transform_indices = @transform_1, window_bounds = array<i64: 16, 1>}, {pipeline_mode = #tpu.pipeline_mode<synchronous>, transform_indices = @transform_2, window_bounds = array<i64: 128, 128>}, {transform_indices = @transform_3, window_bounds = array<i64: 16, 128>}, {transform_indices = @transform_4, window_bounds = array<i64: 1, 128>}]} {
    %c0 = arith.constant 0 : index
    %c0_0 = arith.constant 0 : index
    %0 = vector.load %arg1[%c0, %c0_0] : memref<16x1xi32, #tpu.memory_space<vmem>>, vector<16x1xi32>
    %c0_1 = arith.constant 0 : index
    %c0_2 = arith.constant 0 : index
    %1 = vector.load %arg2[%c0_1, %c0_2] : memref<16x1xi32, #tpu.memory_space<vmem>>, vector<16x1xi32>
    %2 = tpu.iota {dimensions = array<i32: 1>} : vector<16x128xi32>
    %3 = vector.broadcast %0 : vector<16x1xi32> to vector<16x128xi32>
    %4 = arith.cmpi eq, %2, %3 : vector<16x128xi32>
    %5 = arith.extui %4 : vector<16x128xi1> to vector<16x128xi32>
    %6 = arith.sitofp %5 : vector<16x128xi32> to vector<16x128xf32>
    %c0_3 = arith.constant 0 : index
    %c0_4 = arith.constant 0 : index
    %7 = vector.load %arg3[%c0_3, %c0_4] : memref<128x128xf32, #tpu.memory_space<vmem>>, vector<128x128xf32>
    %cst = arith.constant dense<0.000000e+00> : vector<16x128xf32>
    %8 = tpu.matmul %6, %7, %cst {dimension_numbers = #tpu.dot_dimension_numbers<[1], [0], [0], [1], [0, 0, 1, 1], [], []>} : vector<16x128xf32>, vector<128x128xf32>, vector<16x128xf32> -> vector<16x128xf32>
    %c0_5 = arith.constant 0 : index
    %c0_6 = arith.constant 0 : index
    %9 = vector.load %arg4[%c0_5, %c0_6] : memref<16x128xf32, #tpu.memory_space<vmem>>, vector<16x128xf32>
    tpu.vector_store %arg4[%c0_5, %c0_6], %8 {strides = array<i32>} : memref<16x128xf32, #tpu.memory_space<vmem>>, vector<16x128xf32>,
    %cst_7 = arith.constant dense<0xFF800000> : vector<16xf32>
    %10 = vector.multi_reduction <maximumf>, %8, %cst_7 [1] : vector<16x128xf32> to vector<16xf32>
    %11 = vector.shape_cast %10 : vector<16xf32> to vector<16x1xf32>
    %12 = vector.broadcast %11 : vector<16x1xf32> to vector<16x128xf32>
    %13 = arith.subf %8, %12 : vector<16x128xf32>
    %14 = math.exp %13 : vector<16x128xf32>
    %cst_8 = arith.constant dense<0.000000e+00> : vector<16xf32>
    %15 = vector.multi_reduction <add>, %14, %cst_8 [1] : vector<16x128xf32> to vector<16xf32>
    %16 = vector.shape_cast %15 : vector<16xf32> to vector<16x1xf32>
    %17 = math.log %16 : vector<16x1xf32>
    %18 = arith.addf %11, %17 : vector<16x1xf32>
    %19 = vector.broadcast %1 : vector<16x1xi32> to vector<16x128xi32>
    %20 = arith.cmpi eq, %2, %19 : vector<16x128xi32>
    %cst_9 = arith.constant 0.000000e+00 : f32
    %21 = vector.broadcast %cst_9 : f32 to vector<16x128xf32>
    %22 = arith.select %20, %8, %21 : vector<16x128xi1>, vector<16x128xf32>
    %cst_10 = arith.constant dense<0.000000e+00> : vector<16xf32>
    %23 = vector.multi_reduction <add>, %22, %cst_10 [1] : vector<16x128xf32> to vector<16xf32>
    %24 = vector.shape_cast %23 : vector<16xf32> to vector<16x1xf32>
    %25 = arith.subf %18, %24 : vector<16x1xf32>
    %c16_i32 = arith.constant 16 : i32
    %26 = arith.muli %arg0, %c16_i32 : i32
    %27 = tpu.iota {dimensions = array<i32: 0>} : vector<16x1xi32>
    %28 = vector.broadcast %26 : i32 to vector<16x1xi32>
    %29 = arith.addi %28, %27 : vector<16x1xi32>
    %c16_i32_11 = arith.constant 16 : i32
    %30 = vector.broadcast %c16_i32_11 : i32 to vector<16x1xi32>
    %31 = arith.cmpi slt, %29, %30 : vector<16x1xi32>
    %cst_12 = arith.constant 0.000000e+00 : f32
    %32 = vector.broadcast %cst_12 : f32 to vector<16x1xf32>
    %33 = arith.select %31, %25, %32 : vector<16x1xi1>, vector<16x1xf32>
    %34 = vector.shape_cast %33 : vector<16x1xf32> to vector<1x16x1xf32>
    %cst_13 = arith.constant dense<0.000000e+00> : vector<1xf32>
    %35 = vector.multi_reduction <add>, %34, %cst_13 [1, 2] : vector<1x16x1xf32> to vector<1xf32>
    %36 = vector.shape_cast %35 : vector<1xf32> to vector<1x1x1xf32>
    %37 = vector.extract %36[0, 0, 0] : f32 from vector<1x1x1xf32>
    %38 = vector.broadcast %37 : f32 to vector<1x128xf32>
    %c0_14 = arith.constant 0 : index
    %c0_15 = arith.constant 0 : index
    %39 = vector.load %arg5[%c0_14, %c0_15] : memref<1x128xf32, #tpu.memory_space<vmem>>, vector<1x128xf32>
    tpu.vector_store %arg5[%c0_14, %c0_15], %38 {strides = array<i32>} : memref<1x128xf32, #tpu.memory_space<vmem>>, vector<1x128xf32>,
    return
  }
  func.func @transform_0(%arg0: i32) -> (i32, i32) {
    %c0_i32 = arith.constant 0 : i32
    %c0_i32_0 = arith.constant 0 : i32
    return %arg0, %c0_i32 : i32, i32
  }
  func.func @transform_1(%arg0: i32) -> (i32, i32) {
    %c0_i32 = arith.constant 0 : i32
    %c0_i32_0 = arith.constant 0 : i32
    return %arg0, %c0_i32 : i32, i32
  }
  func.func @transform_2(%arg0: i32) -> (i32, i32) {
    %c0_i32 = arith.constant 0 : i32
    %c0_i32_0 = arith.constant 0 : i32
    %c0_i32_1 = arith.constant 0 : i32
    return %c0_i32, %c0_i32_0 : i32, i32
  }
  func.func @transform_3(%arg0: i32) -> (i32, i32) {
    %c0_i32 = arith.constant 0 : i32
    %c0_i32_0 = arith.constant 0 : i32
    return %arg0, %c0_i32 : i32, i32
  }
  func.func @transform_4(%arg0: i32) -> (i32, i32) {
    %c0_i32 = arith.constant 0 : i32
    %c0_i32_0 = arith.constant 0 : i32
    return %c0_i32, %arg0 : i32, i32
  }
}

</mosaic_0001>

<llo_original>
// kernel: tpu_custom_call.1
$region0: #{tpu_custom_call.1}
  #allocation0 [shape = 'u32[]', space=smem, size = 0x4, offset = 0x4, fixed_abs, tag = 'smem constant byte address 0x4 - core index']
  #allocation1 [shape = 'u32[144,128]{1,0:T(1,128)}', space=vmem, size = 0x12000, scoped, tag = 'internal scratch']
  %s0 = inlined_call_operand.vmem [shape: s32[16,1], index: 0, kind: input, shape index: {}]
  %s1 = inlined_call_operand.vmem [shape: s32[16,1], index: 1, kind: input, shape index: {}]
  %s2 = inlined_call_operand.hbm [shape: f32[128,128], index: 2, kind: input, shape index: {}]
  %s3 = inlined_call_operand.hbm [shape: f32[16,128], index: 3, kind: output, shape index: {0}]
  %s4 = inlined_call_operand.hbm [shape: f32[1,128], index: 4, kind: output, shape index: {1}]
  %5 = xla_tuple %s3, %s4
  %s6 = sld [smem:[#allocation0]]
  $region34: #{tpu_custom_call.1} parent=0
    _
  %s8 = ssub.s32 1, %s6
  %s9 = scalar_select 0, %s8, %s6
  $region1: #{tpu_custom_call.1} parent=0
    #allocation2 [shape = 'u8[65536]{0}', space=vmem, size = 0x10000, scoped, tag = 'input window, operand 2, single buffered']
    #allocation3 [shape = 's32[1]{0}', space=sflag, size = 0x4, scoped, tag = 'scoped memory for tpu_custom_call.1']
    #allocation4 [shape = 's32[1]{0}', space=sflag, size = 0x4, scoped, tag = 'scoped memory for tpu_custom_call.1']
    #allocation5 [shape = 'u8[8192]{0}', space=vmem, size = 0x2000, scoped, tag = 'output window, operand 0, single buffered']
    #allocation6 [shape = 'u8[512]{0}', space=vmem, size = 0x400, scoped, tag = 'output window, operand 1, single buffered']
    #allocation7 [shape = 's32[1]{0}', space=sflag, size = 0x4, scoped, tag = 'scoped memory for tpu_custom_call.1']
    %10 = vsyncpa [#allocation3], 0
    %11 = vsyncpa [#allocation4], 0
    %12 = vsyncpa [#allocation7], 0
    // Predicated region
    $region2: #{tpu_custom_call.1} parent=1 // pred_check
      _
    $region3: #{tpu_custom_call.1} parent=1 // pred_check_branch
      %14 = sbr.rel (0) target = $region5
    $region4: #{tpu_custom_call.1} parent=1 // pred_region
      _
    $region5: #{tpu_custom_call.1} parent=1 // pred_fallthru
      _
    // Predicated region
    $region6: #{tpu_custom_call.1} parent=1 // pred_check
      _
    $region7: #{tpu_custom_call.1} parent=1 // pred_check_branch
      %16 = sbr.rel (0) target = $region9
    $region8: #{tpu_custom_call.1} parent=1 // pred_region
      _
    $region9: #{tpu_custom_call.1} parent=1 // pred_fallthru
      _
    // Predicated region
    $region10: #{tpu_custom_call.1} parent=1 // pred_check
      _
    $region11: #{tpu_custom_call.1} parent=1 // pred_check_branch
      %18 = sbr.rel (0) target = $region13
    $region12: #{tpu_custom_call.1} parent=1 // pred_region
      %s20 = ssub.s32 2048, 2048
      %21 = vsyncadd [#allocation3], %s20
      %s22 = sshll.u32 [#allocation2], 4
      %s23 = int_to_ptr.vmem [resolvable:$true] %s22
      %28 = dma.hbm_to_vmem [thread:$0]  %s2, 2048, %s23, [#allocation3], 128, 128, 8
    $region13: #{tpu_custom_call.1} parent=1 // pred_fallthru
      _
    // Predicated region
    $region14: #{tpu_custom_call.1} parent=1 // pred_check
      _
    $region15: #{tpu_custom_call.1} parent=1 // pred_check_branch
      %30 = sbr.rel (0) target = $region17
    $region16: #{tpu_custom_call.1} parent=1 // pred_region
      %31 = dma.done [#allocation3], 2048
    $region17: #{tpu_custom_call.1} parent=1 // pred_fallthru
      _
    %v32 = vld [vmem:[%s0] sm:$0xff]
    %v33 = vld [vmem:[%s0 + $0x8] sm:$0xff]
    %v34 = vld [vmem:[%s1] sm:$0xff]
    %v35 = vld [vmem:[%s1 + $0x8] sm:$0xff]
    %v36 = vlaneseq
    %v37 = vand.u32 %v36, 127
    %38 = vset.pattern.permute.xlu0 0
    %39 = vperm.xlu0 %38, %v32
    %v40 = vpop.permute.xlu0 %39
    %41 = vset.pattern.permute.xlu0 0
    %42 = vperm.xlu0 %41, %v33
    %v43 = vpop.permute.xlu0 %42
    %vm44 = vcmp.eq.s32.totalorder %v37, %v40
    %vm45 = vcmp.eq.s32.totalorder %v37, %v43
    %v46 = vsel %vm44, 1, 0
    %v47 = vsel %vm45, 1, 0
    %v48 = vcvt.s32.f32 %v46
    %v49 = vcvt.s32.f32 %v47
    %v50 = vld [vmem:[#allocation2] sm:$0xff]
    %v51 = vld [vmem:[#allocation2 + $0x8] sm:$0xff]
    %v52 = vld [vmem:[#allocation2 + $0x10] sm:$0xff]
    %v53 = vld [vmem:[#allocation2 + $0x18] sm:$0xff]
    %v54 = vld [vmem:[#allocation2 + $0x20] sm:$0xff]
    %v55 = vld [vmem:[#allocation2 + $0x28] sm:$0xff]
    %v56 = vld [vmem:[#allocation2 + $0x30] sm:$0xff]
    %v57 = vld [vmem:[#allocation2 + $0x38] sm:$0xff]
    %v58 = vld [vmem:[#allocation2 + $0x40] sm:$0xff]
    %v59 = vld [vmem:[#allocation2 + $0x48] sm:$0xff]
    %v60 = vld [vmem:[#allocation2 + $0x50] sm:$0xff]
    %v61 = vld [vmem:[#allocation2 + $0x58] sm:$0xff]
    %v62 = vld [vmem:[#allocation2 + $0x60] sm:$0xff]
    %v63 = vld [vmem:[#allocation2 + $0x68] sm:$0xff]
    %v64 = vld [vmem:[#allocation2 + $0x70] sm:$0xff]
    %v65 = vld [vmem:[#allocation2 + $0x78] sm:$0xff]
    %66 = vmatprep.subr.mxu0 0.0
    %67 = vmatpush1.msra.mxu0 %v50
    %68 = vmatprep.subr.mxu0 0.0
    %69 = vmatpush1.msra.mxu0 %v51
    %70 = vmatprep.subr.mxu0 0.0
    %71 = vmatpush1.msra.mxu0 %v52
    %72 = vmatprep.subr.mxu0 0.0
    %73 = vmatpush1.msra.mxu0 %v53
    %74 = vmatprep.subr.mxu0 0.0
    %75 = vmatpush1.msra.mxu0 %v54
    %76 = vmatprep.subr.mxu0 0.0
    %77 = vmatpush1.msra.mxu0 %v55
    %78 = vmatprep.subr.mxu0 0.0
    %79 = vmatpush1.msra.mxu0 %v56
    %80 = vmatprep.subr.mxu0 0.0
    %81 = vmatpush1.msra.mxu0 %v57
    %82 = vmatprep.subr.mxu0 0.0
    %83 = vmatpush1.msra.mxu0 %v58
    %84 = vmatprep.subr.mxu0 0.0
    %85 = vmatpush1.msra.mxu0 %v59
    %86 = vmatprep.subr.mxu0 0.0
    %87 = vmatpush1.msra.mxu0 %v60
    %88 = vmatprep.subr.mxu0 0.0
    %89 = vmatpush1.msra.mxu0 %v61
    %90 = vmatprep.subr.mxu0 0.0
    %91 = vmatpush1.msra.mxu0 %v62
    %92 = vmatprep.subr.mxu0 0.0
    %93 = vmatpush1.msra.mxu0 %v63
    %94 = vmatprep.subr.mxu0 0.0
    %95 = vmatpush1.msra.mxu0 %v64
    %96 = vmatprep.subr.mxu0 0.0
    %97 = vmatpush1.msra.mxu0 %v65
    %98 = vmatprep.subr.mxu0 0.0
    %99 = vmatpush1.msra.mxu0 0.0
    %100 = vmatprep.subr.mxu0 0.0
    %101 = vmatpush1.msra.mxu0 0.0
    %102 = vmatprep.subr.mxu0 0.0
    %103 = vmatpush1.msra.mxu0 0.0
    %104 = vmatprep.subr.mxu0 0.0
    %105 = vmatpush1.msra.mxu0 0.0
    %106 = vmatprep.subr.mxu0 0.0
    %107 = vmatpush1.msra.mxu0 0.0
    %108 = vmatprep.subr.mxu0 0.0
    %109 = vmatpush1.msra.mxu0 0.0
    %110 = vmatprep.subr.mxu0 0.0
    %111 = vmatpush1.msra.mxu0 0.0
    %112 = vmatprep.subr.mxu0 0.0
    %113 = vmatpush1.msra.mxu0 0.0
    %114 = vmatprep.subr.mxu0 0.0
    %115 = vmatpush1.msra.mxu0 0.0
    %116 = vmatprep.subr.mxu0 0.0
    %117 = vmatpush1.msra.mxu0 0.0
    %118 = vmatprep.subr.mxu0 0.0
    %119 = vmatpush1.msra.mxu0 0.0
    %120 = vmatprep.subr.mxu0 0.0
    %121 = vmatpush1.msra.mxu0 0.0
    %122 = vmatprep.subr.mxu0 0.0
    %123 = vmatpush1.msra.mxu0 0.0
    %124 = vmatprep.subr.mxu0 0.0
    %125 = vmatpush1.msra.mxu0 0.0
    %126 = vmatprep.subr.mxu0 0.0
    %127 = vmatpush1.msra.mxu0 0.0
    %128 = vmatprep.subr.mxu0 0.0
    %129 = vmatpush1.msra.mxu0 0.0
    %130 = vmatprep.mubr.f32.mxu0 0.0
    %131 = vmatmul.mubr.f32.gmra.mrb[0].mxu0 %v48
    %v132 = vpop.f32.mrb[0].mxu0
    %v133 = vadd.f32 0.0, %v132
    %v134 = vpop.f32.mrb[0].mxu0
    %135 = vmatprep.mubr.f32.mxu0 0.0
    %136 = vmatmul.mubr.f32.gmra.mrb[0].mxu0 %v49
    %v137 = vpop.f32.mrb[0].mxu0
    %v138 = vadd.f32 0.0, %v137
    %v139 = vpop.f32.mrb[0].mxu0
    %140 = vdwg.mxu0
    %141 = vst [vmem:[#allocation5] sm:$0xff] %v133
    %142 = vst [vmem:[#allocation5 + $0x8] sm:$0xff] %v138
    %143 = vmax.xlane.f32.xlu0 %v133
    %v144 = vpop.xlane.xlu0 %143
    %145 = vmax.xlane.f32.xlu0 %v138
    %v146 = vpop.xlane.xlu0 %145
    %v147 = vsub.f32 %v133, %v144
    %v148 = vsub.f32 %v138, %v146
    %v149 = vmul.f32 %v147, 1.442695
    %v150 = vpow.pop %v149
    %v151 = vmul.f32 %v148, 1.442695
    %v152 = vpow.pop %v151
    %153 = vadd.xlane.f32.xlu0 %v150
    %v154 = vpop.xlane.xlu0 %153
    %155 = vadd.xlane.f32.xlu0 %v152
    %v156 = vpop.xlane.xlu0 %155
    %v157 = vlog2.pop %v154
    %v158 = vmul.f32 %v157, 0.6931472
    %v159 = vlog2.pop %v156
    %v160 = vmul.f32 %v159, 0.6931472
    %v161 = vadd.f32 %v144, %v158
    %v162 = vadd.f32 %v146, %v160
    %163 = vset.pattern.permute.xlu0 0
    %164 = vperm.xlu0 %163, %v34
    %v165 = vpop.permute.xlu0 %164
    %166 = vset.pattern.permute.xlu0 0
    %167 = vperm.xlu0 %166, %v35
    %v168 = vpop.permute.xlu0 %167
    %vm169 = vcmp.eq.s32.totalorder %v37, %v165
    %vm170 = vcmp.eq.s32.totalorder %v37, %v168
    %v171 = vsel %vm169, %v133, 0.0
    %v172 = vsel %vm170, %v138, 0.0
    %173 = vadd.xlane.f32.xlu0 %v171
    %v174 = vpop.xlane.xlu0 %173
    %175 = vadd.xlane.f32.xlu0 %v172
    %v176 = vpop.xlane.xlu0 %175
    %v177 = vsub.f32 %v161, %v174
    %v178 = vsub.f32 %v162, %v176
    %s179 = smul.u32 0, 16
    %v180 = vlaneseq
    %v181 = vshrl.u32 %v180, 7
    %v182 = vadd.s32 %v181, 8
    %v183 = vstv %s179
    %v184 = vadd.s32 %v183, %v181
    %v185 = vadd.s32 %v183, %v182
    %vm186 = vcmp.lt.s32.totalorder %v184, 16
    %vm187 = vcmp.lt.s32.totalorder %v185, 16
    %v188 = vsel %vm186, %v177, 0.0
    %v189 = vsel %vm187, %v178, 0.0
    %vm190 = vcmask 7168
    %v191 = vsel %vm190, %v188, 0.0
    %v192 = vsel %vm190, %v189, 0.0
    %v193 = vadd.f32 %v191, %v192
    %194 = vadd.xlane.f32.xlu0 %v193
    %v195 = vpop.xlane.xlu0 %194
    %v196 = vrot.slane %v195, 4
    %v197 = vadd.f32 %v195, %v196
    %v198 = vrot.slane %v197, 2
    %v199 = vadd.f32 %v197, %v198
    %v200 = vrot.slane %v199, 1
    %v201 = vadd.f32 %v199, %v200
    %s202 = vtos %v201
    %v203 = vstv %s202
    %204 = vst [vmem:[#allocation6] sm:$0x1] %v203
    // Predicated region
    $region18: #{tpu_custom_call.1} parent=1 // pred_check
      _
    $region19: #{tpu_custom_call.1} parent=1 // pred_check_branch
      %206 = sbr.rel (0) target = $region21
    $region20: #{tpu_custom_call.1} parent=1 // pred_region
      %s208 = ssub.s32 256, 256
      %209 = vsyncadd [#allocation4], %s208
      %s210 = sshll.u32 [#allocation5], 4
      %s211 = int_to_ptr.vmem [resolvable:$true] %s210
      %216 = dma.vmem_to_hbm [thread:$0]  %s211, 256, %s3, [#allocation4], 128, 128, 8
    $region21: #{tpu_custom_call.1} parent=1 // pred_fallthru
      _
    // Predicated region
    $region22: #{tpu_custom_call.1} parent=1 // pred_check
      _
    $region23: #{tpu_custom_call.1} parent=1 // pred_check_branch
      %218 = sbr.rel (0) target = $region25
    $region24: #{tpu_custom_call.1} parent=1 // pred_region
      %s220 = ssub.s32 16, 16
      %221 = vsyncadd [#allocation7], %s220
      %s223 = sshll.u32 [#allocation6], 4
      %s224 = int_to_ptr.vmem [resolvable:$true] %s223
      %226 = dma.vmem_to_hbm [thread:$0]  %s224, 16, %s4, [#allocation7]
    $region25: #{tpu_custom_call.1} parent=1 // pred_fallthru
      _
    // Predicated region
    $region26: #{tpu_custom_call.1} parent=1 // pred_check
      _
    $region27: #{tpu_custom_call.1} parent=1 // pred_check_branch
      %228 = sbr.rel (0) target = $region29
    $region28: #{tpu_custom_call.1} parent=1 // pred_region
      %229 = dma.done [#allocation4], 256
    $region29: #{tpu_custom_call.1} parent=1 // pred_fallthru
      _
    // Predicated region
    $region30: #{tpu_custom_call.1} parent=1 // pred_check
      _
    $region31: #{tpu_custom_call.1} parent=1 // pred_check_branch
      %231 = sbr.rel (0) target = $region33
    $region32: #{tpu_custom_call.1} parent=1 // pred_region
      %232 = dma.done [#allocation7], 16
    $region33: #{tpu_custom_call.1} parent=1 // pred_fallthru
      _
    %233 = vsyncpa [#allocation3], 1
    %234 = vsyncpa [#allocation4], 1
    %235 = vsyncpa [#allocation7], 1

</llo_original>
